<compile_context>
chip_gen: v5e
topology: v5e:2x2
jax: 0.10.0
libtpu: 0.0.40
codegen_flags: <defaults>
</compile_context>

<pallas_src>
import jax
import jax.numpy as jnp
from jax.experimental import pallas as pl
from jax.experimental.pallas import tpu as pltpu

LANE = 128
_VMEM_SPEC = pl.BlockSpec(memory_space=pltpu.MemorySpace.VMEM)


def _round_up(n, m=LANE):
    return ((n + m - 1) // m) * m


def _pad2(a, rows, cols):
    r, c = a.shape
    return jnp.pad(a, ((0, rows - r), (0, cols - c)))


# ---------------------------------------------------------------------------
# Fused kernel (one pallas_call for the whole forward pass)
# ---------------------------------------------------------------------------
def _make_generator_kernel(num_hidden):
    """Build a kernel with signature:
       (x, [w_i, gamma_i, beta_i] * num_hidden, w_out, b_out, out_ref)
    The Python loop is unrolled at trace time; activations never leave VMEM.
    """

    def kernel(x_ref, *refs):
        out_ref = refs[-1]
        h = x_ref[...]                                    # [B, Dp] f32
        idx = 0
        for _ in range(num_hidden):
            w = refs[idx][...]                            # [Din_p, H_p]
            gamma = refs[idx + 1][...]                    # [1, H_p]
            beta = refs[idx + 2][...]                     # [1, H_p]
            idx += 3

            # Linear (bias omitted — exactly cancelled by BN mean subtraction).
            y = jnp.dot(h, w, preferred_element_type=jnp.float32)   # [B, H_p]

            # BatchNorm1d (training mode), folded into one scale/shift.
            mean = jnp.mean(y, axis=0, keepdims=True)                # [1, H_p]
            meansq = jnp.mean(y * y, axis=0, keepdims=True)
            var = meansq - mean * mean                               # biased
            scale = gamma * jax.lax.rsqrt(var + 1e-5)
            shift = beta - mean * scale
            y = y * scale + shift

            # LeakyReLU(0.2)
            h = jnp.where(y > 0, y, 0.2 * y)
            # Dropout(0.2): identity (see TODO(synk) above).

        w_out = refs[idx][...]
        b_out = refs[idx + 1][...]
        out_ref[...] = (
            jnp.dot(h, w_out, preferred_element_type=jnp.float32) + b_out
        )

    return kernel


# ---------------------------------------------------------------------------
# Parameter construction (deterministic, PyTorch-default-like init scales)
# ---------------------------------------------------------------------------
def init_generator_params(key, latent_dim, output_dim, hidden_dims):
    params = {"hidden": [], "out": None}
    dims = [latent_dim] + list(hidden_dims)
    for i in range(len(hidden_dims)):
        fan_in, fan_out = dims[i], dims[i + 1]
        key, kw, kb = jax.random.split(key, 3)
        bound = 1.0 / jnp.sqrt(fan_in)
        # stored pre-transposed: [in_features, out_features]
        w = jax.random.uniform(kw, (fan_in, fan_out), jnp.float32, -bound, bound)
        b = jax.random.uniform(kb, (1, fan_out), jnp.float32, -bound, bound)
        gamma = jnp.ones((1, fan_out), jnp.float32)   # BatchNorm1d weight init
        beta = jnp.zeros((1, fan_out), jnp.float32)   # BatchNorm1d bias init
        params["hidden"].append((w, b, gamma, beta))
    fan_in = hidden_dims[-1]
    key, kw, kb = jax.random.split(key, 3)
    bound = 1.0 / jnp.sqrt(fan_in)
    w = jax.random.uniform(kw, (fan_in, output_dim), jnp.float32, -bound, bound)
    b = jax.random.uniform(kb, (1, output_dim), jnp.float32, -bound, bound)
    params["out"] = (w, b)
    return params


# ---------------------------------------------------------------------------
# Wrapper: pad to lane-dense shapes, single fused pallas_call, slice back.
# ---------------------------------------------------------------------------
@jax.jit
def generator_forward(z, params):
    hidden = params["hidden"]
    w_out, b_out = params["out"]
    B, latent_dim = z.shape
    output_dim = w_out.shape[1]

    # Zero-pad all feature axes up to multiples of 128 lanes. Padded lanes stay
    # exactly zero through every layer (zero weight cols/rows, gamma/beta pads
    # are zero, LeakyReLU(0)=0), so they never contaminate real outputs.
    lat_p = _round_up(latent_dim)
    zp = _pad2(z, B, lat_p)

    flat = []
    din_p = lat_p
    for (w, b, gamma, beta) in hidden:
        # NOTE: hidden bias `b` is intentionally NOT passed — BatchNorm's batch
        # mean subtraction cancels it exactly (training-mode semantics).
        dout_p = _round_up(w.shape[1])
        flat.append(_pad2(w, din_p, dout_p))
        flat.append(_pad2(gamma, 1, dout_p))
        flat.append(_pad2(beta, 1, dout_p))
        din_p = dout_p
    dout_p = _round_up(output_dim)
    flat.append(_pad2(w_out, din_p, dout_p))
    flat.append(_pad2(b_out, 1, dout_p))

    kernel = _make_generator_kernel(len(hidden))
    out_p = pl.pallas_call(
        kernel,
        out_shape=jax.ShapeDtypeStruct((B, dout_p), jnp.float32),
        in_specs=[_VMEM_SPEC] * (1 + len(flat)),
        out_specs=_VMEM_SPEC,
    )(zp, *flat)

    return out_p[:, :output_dim]


# ---------------------------------------------------------------------------
if __name__ == "__main__":
    latent_dim = 16
    hidden_dims = [32, 64]
    output_dim = 48
    batch = 8   # multiple of 8 sublanes; BN stats are over the full batch

    key = jax.random.PRNGKey(0)
    k_params, k_z = jax.random.split(key)
    params = init_generator_params(k_params, latent_dim, output_dim, hidden_dims)
    z = jax.random.normal(k_z, (batch, latent_dim), jnp.float32)

    out = generator_forward(z, params)
    jax.block_until_ready(out)

    assert out.shape == (batch, output_dim), out.shape
    assert out.dtype == jnp.float32
    assert bool(jnp.all(jnp.isfinite(out)))
    print("KERNEL_OK")
</pallas_src>

<mosaic_0001>
module attributes {stable_mosaic.version = 11 : i64} {
  func.func @kernel(%arg0: memref<8x128xf32, #tpu.memory_space<vmem>>, %arg1: memref<128x128xf32, #tpu.memory_space<vmem>>, %arg2: memref<1x128xf32, #tpu.memory_space<vmem>>, %arg3: memref<1x128xf32, #tpu.memory_space<vmem>>, %arg4: memref<128x128xf32, #tpu.memory_space<vmem>>, %arg5: memref<1x128xf32, #tpu.memory_space<vmem>>, %arg6: memref<1x128xf32, #tpu.memory_space<vmem>>, %arg7: memref<128x128xf32, #tpu.memory_space<vmem>>, %arg8: memref<1x128xf32, #tpu.memory_space<vmem>>, %arg9: memref<8x128xf32, #tpu.memory_space<vmem>>) attributes {dimension_semantics = [], scalar_prefetch = 0 : i64, scratch_operands = 0 : i64, tpu.core_type = #tpu.core_type<tc>} {
    %c0 = arith.constant 0 : index
    %c0_0 = arith.constant 0 : index
    %0 = vector.load %arg0[%c0, %c0_0] : memref<8x128xf32, #tpu.memory_space<vmem>>, vector<8x128xf32>
    %c0_1 = arith.constant 0 : index
    %c0_2 = arith.constant 0 : index
    %1 = vector.load %arg1[%c0_1, %c0_2] : memref<128x128xf32, #tpu.memory_space<vmem>>, vector<128x128xf32>
    %c0_3 = arith.constant 0 : index
    %c0_4 = arith.constant 0 : index
    %2 = vector.load %arg2[%c0_3, %c0_4] : memref<1x128xf32, #tpu.memory_space<vmem>>, vector<1x128xf32>
    %c0_5 = arith.constant 0 : index
    %c0_6 = arith.constant 0 : index
    %3 = vector.load %arg3[%c0_5, %c0_6] : memref<1x128xf32, #tpu.memory_space<vmem>>, vector<1x128xf32>
    %cst = arith.constant dense<0.000000e+00> : vector<8x128xf32>
    %4 = tpu.matmul %0, %1, %cst {dimension_numbers = #tpu.dot_dimension_numbers<[1], [0], [0], [1], [0, 0, 1, 1], [], []>} : vector<8x128xf32>, vector<128x128xf32>, vector<8x128xf32> -> vector<8x128xf32>
    %cst_7 = arith.constant dense<0.000000e+00> : vector<128xf32>
    %5 = vector.multi_reduction <add>, %4, %cst_7 [0] : vector<8x128xf32> to vector<128xf32>
    %6 = vector.shape_cast %5 : vector<128xf32> to vector<1x128xf32>
    %cst_8 = arith.constant 8.000000e+00 : f32
    %7 = vector.broadcast %cst_8 : f32 to vector<1x128xf32>
    %8 = arith.divf %6, %7 : vector<1x128xf32>
    %9 = arith.mulf %4, %4 : vector<8x128xf32>
    %cst_9 = arith.constant dense<0.000000e+00> : vector<128xf32>
    %10 = vector.multi_reduction <add>, %9, %cst_9 [0] : vector<8x128xf32> to vector<128xf32>
    %11 = vector.shape_cast %10 : vector<128xf32> to vector<1x128xf32>
    %cst_10 = arith.constant 8.000000e+00 : f32
    %12 = vector.broadcast %cst_10 : f32 to vector<1x128xf32>
    %13 = arith.divf %11, %12 : vector<1x128xf32>
    %14 = arith.mulf %8, %8 : vector<1x128xf32>
    %15 = arith.subf %13, %14 : vector<1x128xf32>
    %cst_11 = arith.constant 9.99999974E-6 : f32
    %16 = vector.broadcast %cst_11 : f32 to vector<1x128xf32>
    %17 = arith.addf %15, %16 : vector<1x128xf32>
    %18 = math.rsqrt %17 : vector<1x128xf32>
    %19 = arith.mulf %2, %18 : vector<1x128xf32>
    %20 = arith.mulf %8, %19 : vector<1x128xf32>
    %21 = arith.subf %3, %20 : vector<1x128xf32>
    %22 = vector.broadcast %19 : vector<1x128xf32> to vector<8x128xf32>
    %23 = arith.mulf %4, %22 : vector<8x128xf32>
    %24 = vector.broadcast %21 : vector<1x128xf32> to vector<8x128xf32>
    %25 = arith.addf %23, %24 : vector<8x128xf32>
    %cst_12 = arith.constant 0.000000e+00 : f32
    %26 = vector.broadcast %cst_12 : f32 to vector<8x128xf32>
    %27 = arith.cmpf ogt, %25, %26 : vector<8x128xf32>
    %cst_13 = arith.constant 2.000000e-01 : f32
    %28 = vector.broadcast %cst_13 : f32 to vector<8x128xf32>
    %29 = arith.mulf %28, %25 : vector<8x128xf32>
    %30 = arith.select %27, %25, %29 : vector<8x128xi1>, vector<8x128xf32>
    %c0_14 = arith.constant 0 : index
    %c0_15 = arith.constant 0 : index
    %31 = vector.load %arg4[%c0_14, %c0_15] : memref<128x128xf32, #tpu.memory_space<vmem>>, vector<128x128xf32>
    %c0_16 = arith.constant 0 : index
    %c0_17 = arith.constant 0 : index
    %32 = vector.load %arg5[%c0_16, %c0_17] : memref<1x128xf32, #tpu.memory_space<vmem>>, vector<1x128xf32>
    %c0_18 = arith.constant 0 : index
    %c0_19 = arith.constant 0 : index
    %33 = vector.load %arg6[%c0_18, %c0_19] : memref<1x128xf32, #tpu.memory_space<vmem>>, vector<1x128xf32>
    %cst_20 = arith.constant dense<0.000000e+00> : vector<8x128xf32>
    %34 = tpu.matmul %30, %31, %cst_20 {dimension_numbers = #tpu.dot_dimension_numbers<[1], [0], [0], [1], [0, 0, 1, 1], [], []>} : vector<8x128xf32>, vector<128x128xf32>, vector<8x128xf32> -> vector<8x128xf32>
    %cst_21 = arith.constant dense<0.000000e+00> : vector<128xf32>
    %35 = vector.multi_reduction <add>, %34, %cst_21 [0] : vector<8x128xf32> to vector<128xf32>
    %36 = vector.shape_cast %35 : vector<128xf32> to vector<1x128xf32>
    %cst_22 = arith.constant 8.000000e+00 : f32
    %37 = vector.broadcast %cst_22 : f32 to vector<1x128xf32>
    %38 = arith.divf %36, %37 : vector<1x128xf32>
    %39 = arith.mulf %34, %34 : vector<8x128xf32>
    %cst_23 = arith.constant dense<0.000000e+00> : vector<128xf32>
    %40 = vector.multi_reduction <add>, %39, %cst_23 [0] : vector<8x128xf32> to vector<128xf32>
    %41 = vector.shape_cast %40 : vector<128xf32> to vector<1x128xf32>
    %cst_24 = arith.constant 8.000000e+00 : f32
    %42 = vector.broadcast %cst_24 : f32 to vector<1x128xf32>
    %43 = arith.divf %41, %42 : vector<1x128xf32>
    %44 = arith.mulf %38, %38 : vector<1x128xf32>
    %45 = arith.subf %43, %44 : vector<1x128xf32>
    %cst_25 = arith.constant 9.99999974E-6 : f32
    %46 = vector.broadcast %cst_25 : f32 to vector<1x128xf32>
    %47 = arith.addf %45, %46 : vector<1x128xf32>
    %48 = math.rsqrt %47 : vector<1x128xf32>
    %49 = arith.mulf %32, %48 : vector<1x128xf32>
    %50 = arith.mulf %38, %49 : vector<1x128xf32>
    %51 = arith.subf %33, %50 : vector<1x128xf32>
    %52 = vector.broadcast %49 : vector<1x128xf32> to vector<8x128xf32>
    %53 = arith.mulf %34, %52 : vector<8x128xf32>
    %54 = vector.broadcast %51 : vector<1x128xf32> to vector<8x128xf32>
    %55 = arith.addf %53, %54 : vector<8x128xf32>
    %cst_26 = arith.constant 0.000000e+00 : f32
    %56 = vector.broadcast %cst_26 : f32 to vector<8x128xf32>
    %57 = arith.cmpf ogt, %55, %56 : vector<8x128xf32>
    %cst_27 = arith.constant 2.000000e-01 : f32
    %58 = vector.broadcast %cst_27 : f32 to vector<8x128xf32>
    %59 = arith.mulf %58, %55 : vector<8x128xf32>
    %60 = arith.select %57, %55, %59 : vector<8x128xi1>, vector<8x128xf32>
    %c0_28 = arith.constant 0 : index
    %c0_29 = arith.constant 0 : index
    %61 = vector.load %arg7[%c0_28, %c0_29] : memref<128x128xf32, #tpu.memory_space<vmem>>, vector<128x128xf32>
    %c0_30 = arith.constant 0 : index
    %c0_31 = arith.constant 0 : index
    %62 = vector.load %arg8[%c0_30, %c0_31] : memref<1x128xf32, #tpu.memory_space<vmem>>, vector<1x128xf32>
    %cst_32 = arith.constant dense<0.000000e+00> : vector<8x128xf32>
    %63 = tpu.matmul %60, %61, %cst_32 {dimension_numbers = #tpu.dot_dimension_numbers<[1], [0], [0], [1], [0, 0, 1, 1], [], []>} : vector<8x128xf32>, vector<128x128xf32>, vector<8x128xf32> -> vector<8x128xf32>
    %64 = vector.broadcast %62 : vector<1x128xf32> to vector<8x128xf32>
    %65 = arith.addf %63, %64 : vector<8x128xf32>
    %c0_33 = arith.constant 0 : index
    %c0_34 = arith.constant 0 : index
    %66 = vector.load %arg9[%c0_33, %c0_34] : memref<8x128xf32, #tpu.memory_space<vmem>>, vector<8x128xf32>
    tpu.vector_store %arg9[%c0_33, %c0_34], %65 {strides = array<i32>} : memref<8x128xf32, #tpu.memory_space<vmem>>, vector<8x128xf32>,
    return
  }
}

</mosaic_0001>

<llo_original>
// kernel: generator_forward.1
$region0: #{generator_forward.1}
  #allocation0 [shape = 'u32[]', space=smem, size = 0x4, offset = 0x4, fixed_abs, tag = 'smem constant byte address 0x4 - core index']
  #allocation1 [shape = 'u32[72,128]{1,0:T(1,128)}', space=vmem, size = 0x9000, scoped, tag = 'internal scratch']
  %s0 = inlined_call_operand.vmem [shape: f32[8,128], index: 0, kind: input, shape index: {}]
  %s1 = inlined_call_operand.vmem [shape: f32[128,128], index: 1, kind: input, shape index: {}]
  %s2 = inlined_call_operand.vmem [shape: f32[1,128], index: 2, kind: input, shape index: {}]
  %s3 = inlined_call_operand.vmem [shape: f32[1,128], index: 3, kind: input, shape index: {}]
  %s4 = inlined_call_operand.vmem [shape: f32[128,128], index: 4, kind: input, shape index: {}]
  %s5 = inlined_call_operand.vmem [shape: f32[1,128], index: 5, kind: input, shape index: {}]
  %s6 = inlined_call_operand.vmem [shape: f32[1,128], index: 6, kind: input, shape index: {}]
  %s7 = inlined_call_operand.vmem [shape: f32[128,128], index: 7, kind: input, shape index: {}]
  %s8 = inlined_call_operand.vmem [shape: f32[1,128], index: 8, kind: input, shape index: {}]
  %s9 = inlined_call_operand.hbm [shape: f32[8,128], index: 9, kind: output, shape index: {}]
  %s10 = sld [smem:[#allocation0]]
  $region46: #{generator_forward.1} parent=0
    _
  %s12 = ssub.s32 1, %s10
  %s13 = scalar_select 0, %s12, %s10
  $region1: #{generator_forward.1} parent=0
    #allocation2 [shape = 'u8[4096]{0}', space=vmem, size = 0x1000, scoped, tag = 'output window, operand 0, single buffered']
    #allocation3 [shape = 's32[1]{0}', space=sflag, size = 0x4, scoped, tag = 'scoped memory for generator_forward.1']
    %14 = vsyncpa [#allocation3], 0
    // Predicated region
    $region2: #{generator_forward.1} parent=1 // pred_check
      _
    $region3: #{generator_forward.1} parent=1 // pred_check_branch
      %16 = sbr.rel (0) target = $region5
    $region4: #{generator_forward.1} parent=1 // pred_region
      _
    $region5: #{generator_forward.1} parent=1 // pred_fallthru
      _
    // Predicated region
    $region6: #{generator_forward.1} parent=1 // pred_check
      _
    $region7: #{generator_forward.1} parent=1 // pred_check_branch
      %18 = sbr.rel (0) target = $region9
    $region8: #{generator_forward.1} parent=1 // pred_region
      _
    $region9: #{generator_forward.1} parent=1 // pred_fallthru
      _
    // Predicated region
    $region10: #{generator_forward.1} parent=1 // pred_check
      _
    $region11: #{generator_forward.1} parent=1 // pred_check_branch
      %20 = sbr.rel (0) target = $region13
    $region12: #{generator_forward.1} parent=1 // pred_region
      _
    $region13: #{generator_forward.1} parent=1 // pred_fallthru
      _
    // Predicated region
    $region14: #{generator_forward.1} parent=1 // pred_check
      _
    $region15: #{generator_forward.1} parent=1 // pred_check_branch
      %22 = sbr.rel (0) target = $region17
    $region16: #{generator_forward.1} parent=1 // pred_region
      _
    $region17: #{generator_forward.1} parent=1 // pred_fallthru
      _
    // Predicated region
    $region18: #{generator_forward.1} parent=1 // pred_check
      _
    $region19: #{generator_forward.1} parent=1 // pred_check_branch
      %24 = sbr.rel (0) target = $region21
    $region20: #{generator_forward.1} parent=1 // pred_region
      _
    $region21: #{generator_forward.1} parent=1 // pred_fallthru
      _
    // Predicated region
    $region22: #{generator_forward.1} parent=1 // pred_check
      _
    $region23: #{generator_forward.1} parent=1 // pred_check_branch
      %26 = sbr.rel (0) target = $region25
    $region24: #{generator_forward.1} parent=1 // pred_region
      _
    $region25: #{generator_forward.1} parent=1 // pred_fallthru
      _
    // Predicated region
    $region26: #{generator_forward.1} parent=1 // pred_check
      _
    $region27: #{generator_forward.1} parent=1 // pred_check_branch
      %28 = sbr.rel (0) target = $region29
    $region28: #{generator_forward.1} parent=1 // pred_region
      _
    $region29: #{generator_forward.1} parent=1 // pred_fallthru
      _
    // Predicated region
    $region30: #{generator_forward.1} parent=1 // pred_check
      _
    $region31: #{generator_forward.1} parent=1 // pred_check_branch
      %30 = sbr.rel (0) target = $region33
    $region32: #{generator_forward.1} parent=1 // pred_region
      _
    $region33: #{generator_forward.1} parent=1 // pred_fallthru
      _
    // Predicated region
    $region34: #{generator_forward.1} parent=1 // pred_check
      _
    $region35: #{generator_forward.1} parent=1 // pred_check_branch
      %32 = sbr.rel (0) target = $region37
    $region36: #{generator_forward.1} parent=1 // pred_region
      _
    $region37: #{generator_forward.1} parent=1 // pred_fallthru
      _
    %v33 = vld [vmem:[%s0] sm:$0xff]
    %v34 = vld [vmem:[%s1] sm:$0xff]
    %v35 = vld [vmem:[%s1 + $0x8] sm:$0xff]
    %v36 = vld [vmem:[%s1 + $0x10] sm:$0xff]
    %v37 = vld [vmem:[%s1 + $0x18] sm:$0xff]
    %v38 = vld [vmem:[%s1 + $0x20] sm:$0xff]
    %v39 = vld [vmem:[%s1 + $0x28] sm:$0xff]
    %v40 = vld [vmem:[%s1 + $0x30] sm:$0xff]
    %v41 = vld [vmem:[%s1 + $0x38] sm:$0xff]
    %v42 = vld [vmem:[%s1 + $0x40] sm:$0xff]
    %v43 = vld [vmem:[%s1 + $0x48] sm:$0xff]
    %v44 = vld [vmem:[%s1 + $0x50] sm:$0xff]
    %v45 = vld [vmem:[%s1 + $0x58] sm:$0xff]
    %v46 = vld [vmem:[%s1 + $0x60] sm:$0xff]
    %v47 = vld [vmem:[%s1 + $0x68] sm:$0xff]
    %v48 = vld [vmem:[%s1 + $0x70] sm:$0xff]
    %v49 = vld [vmem:[%s1 + $0x78] sm:$0xff]
    %v50 = vld [vmem:[%s2] sm:$0x1]
    %v51 = vld [vmem:[%s3] sm:$0x1]
    %52 = vmatpush.msra.mxu0 %v49
    %53 = vmatpush.msra.mxu0 %v48
    %54 = vmatpush.msra.mxu0 %v47
    %55 = vmatpush.msra.mxu0 %v46
    %56 = vmatpush.msra.mxu0 %v45
    %57 = vmatpush.msra.mxu0 %v44
    %58 = vmatpush.msra.mxu0 %v43
    %59 = vmatpush.msra.mxu0 %v42
    %60 = vmatpush.msra.mxu0 %v41
    %61 = vmatpush.msra.mxu0 %v40
    %62 = vmatpush.msra.mxu0 %v39
    %63 = vmatpush.msra.mxu0 %v38
    %64 = vmatpush.msra.mxu0 %v37
    %65 = vmatpush.msra.mxu0 %v36
    %66 = vmatpush.msra.mxu0 %v35
    %67 = vmatpush.msra.mxu0 %v34
    %68 = vmatmul.f32.gmra.mxu0 %v33
    %v69 = vpop.f32.mrf.mxu0
    %v70 = vadd.f32 0.0, %v69
    %71 = vdwg.mxu0
    %v72 = vrot.slane %v70, 4
    %v73 = vadd.f32 %v70, %v72
    %v74 = vrot.slane %v73, 2
    %v75 = vadd.f32 %v73, %v74
    %v76 = vrot.slane %v75, 1
    %v77 = vadd.f32 %v75, %v76
    %v78 = vrcp.pop 8.0
    %v79 = vmul.f32 8.0, %v78
    %v80 = vsub.f32 1.0, %v79
    %v81 = vmul.f32 %v78, %v80
    %v82 = vadd.f32 %v78, %v81
    %vm83 = vweird.f32 %v78
    %v84 = vsel %vm83, %v78, %v82
    %v85 = vmul.f32 %v77, %v84
    %v86 = vmul.f32 %v70, %v70
    %v87 = vrot.slane %v86, 4
    %v88 = vadd.f32 %v86, %v87
    %v89 = vrot.slane %v88, 2
    %v90 = vadd.f32 %v88, %v89
    %v91 = vrot.slane %v90, 1
    %v92 = vadd.f32 %v90, %v91
    %v93 = vmul.f32 %v92, %v84
    %v94 = vmul.f32 %v85, %v85
    %v95 = vsub.f32 %v93, %v94
    %v96 = vadd.f32 %v95, 1e-05
    %v97 = vrsqrt.pop %v96
    %v98 = vmul.f32 %v97, %v96
    %v99 = vmul.f32 %v98, %v97
    %v100 = vmul.f32 0.5, %v99
    %v101 = vsub.f32 1.5, %v100
    %v102 = vmul.f32 %v97, %v101
    %vm103 = vweird.f32 %v96
    %vm104 = vweird.f32 %v97
    %vm105 = vmor %vm103, %vm104
    %v106 = vsel %vm105, %v97, %v102
    %v107 = vmul.f32 %v50, %v106
    %v108 = vmul.f32 %v85, %v107
    %v109 = vsub.f32 %v51, %v108
    %v111 = vperm.slane %v107, 0
    %v113 = vmul.f32 %v70, %v111
    %v115 = vperm.slane %v109, 0
    %v117 = vadd.f32 %v113, %v115
    %vm118 = vcmp.gt.f32.partialorder %v117, 0.0
    %v119 = vmul.f32 %v117, 0.2
    %v120 = vsel %vm118, %v117, %v119
    %v121 = vld [vmem:[%s4] sm:$0xff]
    %v122 = vld [vmem:[%s4 + $0x8] sm:$0xff]
    %v123 = vld [vmem:[%s4 + $0x10] sm:$0xff]
    %v124 = vld [vmem:[%s4 + $0x18] sm:$0xff]
    %v125 = vld [vmem:[%s4 + $0x20] sm:$0xff]
    %v126 = vld [vmem:[%s4 + $0x28] sm:$0xff]
    %v127 = vld [vmem:[%s4 + $0x30] sm:$0xff]
    %v128 = vld [vmem:[%s4 + $0x38] sm:$0xff]
    %v129 = vld [vmem:[%s4 + $0x40] sm:$0xff]
    %v130 = vld [vmem:[%s4 + $0x48] sm:$0xff]
    %v131 = vld [vmem:[%s4 + $0x50] sm:$0xff]
    %v132 = vld [vmem:[%s4 + $0x58] sm:$0xff]
    %v133 = vld [vmem:[%s4 + $0x60] sm:$0xff]
    %v134 = vld [vmem:[%s4 + $0x68] sm:$0xff]
    %v135 = vld [vmem:[%s4 + $0x70] sm:$0xff]
    %v136 = vld [vmem:[%s4 + $0x78] sm:$0xff]
    %v137 = vld [vmem:[%s5] sm:$0x1]
    %v138 = vld [vmem:[%s6] sm:$0x1]
    %139 = vmatpush.msra.mxu0 %v136
    %140 = vmatpush.msra.mxu0 %v135
    %141 = vmatpush.msra.mxu0 %v134
    %142 = vmatpush.msra.mxu0 %v133
    %143 = vmatpush.msra.mxu0 %v132
    %144 = vmatpush.msra.mxu0 %v131
    %145 = vmatpush.msra.mxu0 %v130
    %146 = vmatpush.msra.mxu0 %v129
    %147 = vmatpush.msra.mxu0 %v128
    %148 = vmatpush.msra.mxu0 %v127
    %149 = vmatpush.msra.mxu0 %v126
    %150 = vmatpush.msra.mxu0 %v125
    %151 = vmatpush.msra.mxu0 %v124
    %152 = vmatpush.msra.mxu0 %v123
    %153 = vmatpush.msra.mxu0 %v122
    %154 = vmatpush.msra.mxu0 %v121
    %155 = vmatmul.f32.gmra.mxu0 %v120
    %v156 = vpop.f32.mrf.mxu0
    %v157 = vadd.f32 0.0, %v156
    %158 = vdwg.mxu0
    %v159 = vrot.slane %v157, 4
    %v160 = vadd.f32 %v157, %v159
    %v161 = vrot.slane %v160, 2
    %v162 = vadd.f32 %v160, %v161
    %v163 = vrot.slane %v162, 1
    %v164 = vadd.f32 %v162, %v163
    %v165 = vmul.f32 %v164, %v84
    %v166 = vmul.f32 %v157, %v157
    %v167 = vrot.slane %v166, 4
    %v168 = vadd.f32 %v166, %v167
    %v169 = vrot.slane %v168, 2
    %v170 = vadd.f32 %v168, %v169
    %v171 = vrot.slane %v170, 1
    %v172 = vadd.f32 %v170, %v171
    %v173 = vmul.f32 %v172, %v84
    %v174 = vmul.f32 %v165, %v165
    %v175 = vsub.f32 %v173, %v174
    %v176 = vadd.f32 %v175, 1e-05
    %v177 = vrsqrt.pop %v176
    %v178 = vmul.f32 %v177, %v176
    %v179 = vmul.f32 %v178, %v177
    %v180 = vmul.f32 0.5, %v179
    %v181 = vsub.f32 1.5, %v180
    %v182 = vmul.f32 %v177, %v181
    %vm183 = vweird.f32 %v176
    %vm184 = vweird.f32 %v177
    %vm185 = vmor %vm183, %vm184
    %v186 = vsel %vm185, %v177, %v182
    %v187 = vmul.f32 %v137, %v186
    %v188 = vmul.f32 %v165, %v187
    %v189 = vsub.f32 %v138, %v188
    %v191 = vperm.slane %v187, 0
    %v193 = vmul.f32 %v157, %v191
    %v195 = vperm.slane %v189, 0
    %v197 = vadd.f32 %v193, %v195
    %vm198 = vcmp.gt.f32.partialorder %v197, 0.0
    %v199 = vmul.f32 %v197, 0.2
    %v200 = vsel %vm198, %v197, %v199
    %v201 = vld [vmem:[%s7] sm:$0xff]
    %v202 = vld [vmem:[%s7 + $0x8] sm:$0xff]
    %v203 = vld [vmem:[%s7 + $0x10] sm:$0xff]
    %v204 = vld [vmem:[%s7 + $0x18] sm:$0xff]
    %v205 = vld [vmem:[%s7 + $0x20] sm:$0xff]
    %v206 = vld [vmem:[%s7 + $0x28] sm:$0xff]
    %v207 = vld [vmem:[%s7 + $0x30] sm:$0xff]
    %v208 = vld [vmem:[%s7 + $0x38] sm:$0xff]
    %v209 = vld [vmem:[%s7 + $0x40] sm:$0xff]
    %v210 = vld [vmem:[%s7 + $0x48] sm:$0xff]
    %v211 = vld [vmem:[%s7 + $0x50] sm:$0xff]
    %v212 = vld [vmem:[%s7 + $0x58] sm:$0xff]
    %v213 = vld [vmem:[%s7 + $0x60] sm:$0xff]
    %v214 = vld [vmem:[%s7 + $0x68] sm:$0xff]
    %v215 = vld [vmem:[%s7 + $0x70] sm:$0xff]
    %v216 = vld [vmem:[%s7 + $0x78] sm:$0xff]
    %v217 = vld [vmem:[%s8] sm:$0x1]
    %v219 = vperm.slane %v217, 0
    %221 = vmatpush.msra.mxu0 %v216
    %222 = vmatpush.msra.mxu0 %v215
    %223 = vmatpush.msra.mxu0 %v214
    %224 = vmatpush.msra.mxu0 %v213
    %225 = vmatpush.msra.mxu0 %v212
    %226 = vmatpush.msra.mxu0 %v211
    %227 = vmatpush.msra.mxu0 %v210
    %228 = vmatpush.msra.mxu0 %v209
    %229 = vmatpush.msra.mxu0 %v208
    %230 = vmatpush.msra.mxu0 %v207
    %231 = vmatpush.msra.mxu0 %v206
    %232 = vmatpush.msra.mxu0 %v205
    %233 = vmatpush.msra.mxu0 %v204
    %234 = vmatpush.msra.mxu0 %v203
    %235 = vmatpush.msra.mxu0 %v202
    %236 = vmatpush.msra.mxu0 %v201
    %237 = vmatmul.f32.gmra.mxu0 %v200
    %v238 = vpop.f32.mrf.mxu0
    %v239 = vadd.f32 %v219, %v238
    %240 = vdwg.mxu0
    %241 = vst [vmem:[#allocation2] sm:$0xff] %v239
    // Predicated region
    $region38: #{generator_forward.1} parent=1 // pred_check
      _
    $region39: #{generator_forward.1} parent=1 // pred_check_branch
      %243 = sbr.rel (0) target = $region41
    $region40: #{generator_forward.1} parent=1 // pred_region
      %245 = vsyncadd [#allocation3], 0
      %s247 = sshll.u32 [#allocation2], 4
      %s248 = int_to_ptr.vmem [resolvable:$true] %s247
      %s249 = sshll.u32 %s9, 4
      %s250 = int_to_ptr.hbm [resolvable:$true] %s249
      %252 = dma.vmem_to_hbm [thread:$0]  %s248, 128, %s250, [#allocation3]
    $region41: #{generator_forward.1} parent=1 // pred_fallthru
      _
    // Predicated region
    $region42: #{generator_forward.1} parent=1 // pred_check
      _
    $region43: #{generator_forward.1} parent=1 // pred_check_branch
      %254 = sbr.rel (0) target = $region45
    $region44: #{generator_forward.1} parent=1 // pred_region
      %256 = dma.done [#allocation3], 128
    $region45: #{generator_forward.1} parent=1 // pred_fallthru
      _
    %257 = vsyncpa [#allocation3], 1

</llo_original>
